<compile_context>
chip_gen: v5e
topology: v5e:2x2
jax: 0.10.0
libtpu: 0.0.40
codegen_flags: <defaults>
</compile_context>

<pallas_src>
import jax
import jax.numpy as jnp
from jax.experimental import pallas as pl
from jax.experimental.pallas import tpu as pltpu

EPS = 1e-5  # nn.LayerNorm default


def _round_up(x, m):
    return (x + m - 1) // m * m


def _patch_embed_kernel(p_ref, w_ref, b_ref, g_ref, beta_ref, o_ref):
    # p_ref: (TN, K) bf16; w_ref: (K, C2) bf16; b/g/beta: (1, C2) f32; o_ref: (TN, C2)
    y = jnp.dot(p_ref[...], w_ref[...], preferred_element_type=jnp.float32)
    y = y + b_ref[...].astype(jnp.float32)               # conv bias (before LN)

    c2 = y.shape[-1]
    inv_c2 = jnp.float32(1.0 / c2)
    # One-pass LayerNorm statistics (biased variance, like PyTorch).
    s1 = jnp.sum(y, axis=-1, keepdims=True)
    s2 = jnp.sum(y * y, axis=-1, keepdims=True)
    mean = s1 * inv_c2
    var = jnp.maximum(s2 * inv_c2 - mean * mean, 0.0)
    y_hat = (y - mean) * jax.lax.rsqrt(var + EPS)
    o_ref[...] = (y_hat * g_ref[...] + beta_ref[...]).astype(o_ref.dtype)


def _im2col(x, kh, kw, stride, pad):
    """x: (B, C, H, W) -> patches (B*Ho*Wo, kh*kw*C) ordered (kh, kw, c).

    Converts to NHWC first (1x-input relayout) so the final reshape to
    (N, K) is layout-free — no transpose of the 3x-sized patches tensor.
    """
    B, C, H, W = x.shape
    xh = jnp.transpose(x, (0, 2, 3, 1))                       # (B, H, W, C)
    xh = jnp.pad(xh, ((0, 0), (pad, pad), (pad, pad), (0, 0)))
    Ho = (H + 2 * pad - kh) // stride + 1
    Wo = (W + 2 * pad - kw) // stride + 1
    slices = []
    for di in range(kh):
        for dj in range(kw):
            sl = xh[:, di:di + stride * Ho:stride, dj:dj + stride * Wo:stride, :]
            slices.append(sl)                                  # (B, Ho, Wo, C)
    pat = jnp.stack(slices, axis=3)                            # (B, Ho, Wo, kh*kw, C)
    return pat.reshape(B * Ho * Wo, kh * kw * C), Ho, Wo


def patch_embed(x, w, b, gamma, beta, *, patch_size=7, stride=4, tn=512,
                compute_dtype=jnp.bfloat16):
    """x: (B, C1, H, W) NCHW; w: (C2, C1, kh, kw); returns ((B, Ho*Wo, C2), Ho, Wo)."""
    B, C1, H, W = x.shape
    C2 = w.shape[0]
    pad = patch_size // 2

    patches, Ho, Wo = _im2col(x, patch_size, patch_size, stride, pad)  # (N, K)
    N, K = patches.shape

    # Weight as (K, C2) with K ordered (kh, kw, c1) to match the im2col layout.
    w_mat = jnp.transpose(w, (2, 3, 1, 0)).reshape(K, C2)

    # Memory-bound: stream the big operands as bf16; accumulate in f32 on MXU.
    patches = patches.astype(compute_dtype)
    w_mat = w_mat.astype(compute_dtype)

    # Token-tile size: sublane/packing-aligned (16 for bf16), capped for VMEM.
    TN = _round_up(min(tn, _round_up(N, 16)), 16)
    N_pad = _round_up(N, TN)
    if N_pad != N:
        patches = jnp.pad(patches, ((0, N_pad - N), (0, 0)))

    grid = (N_pad // TN,)
    itemsize = jnp.dtype(compute_dtype).itemsize
    out_itemsize = jnp.dtype(x.dtype).itemsize
    cost = pl.CostEstimate(
        flops=2 * N_pad * K * C2,
        transcendentals=0,
        bytes_accessed=(N_pad * K * itemsize          # patches stream
                        + K * C2 * itemsize           # weight (resident)
                        + N_pad * C2 * out_itemsize   # output stream
                        + 3 * C2 * 4),                # bias / gamma / beta
    )

    out = pl.pallas_call(
        _patch_embed_kernel,
        out_shape=jax.ShapeDtypeStruct((N_pad, C2), x.dtype),
        grid=grid,
        in_specs=[
            pl.BlockSpec((TN, K), lambda i: (i, 0)),      # streamed / pipelined
            pl.BlockSpec((K, C2), lambda i: (0, 0)),      # resident
            pl.BlockSpec((1, C2), lambda i: (0, 0)),      # resident
            pl.BlockSpec((1, C2), lambda i: (0, 0)),      # resident
            pl.BlockSpec((1, C2), lambda i: (0, 0)),      # resident
        ],
        out_specs=pl.BlockSpec((TN, C2), lambda i: (i, 0)),
        compiler_params=pltpu.CompilerParams(
            dimension_semantics=("parallel",)),           # megacore on v7x
        cost_estimate=cost,
    )(patches, w_mat,
      b.reshape(1, C2).astype(jnp.float32),
      gamma.reshape(1, C2).astype(jnp.float32),
      beta.reshape(1, C2).astype(jnp.float32))

    out = out[:N].reshape(B, Ho * Wo, C2)
    return out, Ho, Wo


if __name__ == "__main__":
    key = jax.random.PRNGKey(0)
    B, C1, H, W = 2, 4, 16, 16
    C2, patch_size, stride = 32, 7, 4

    kx, kw_, kb = jax.random.split(key, 3)
    x = jax.random.normal(kx, (B, C1, H, W), dtype=jnp.float32)
    # Deterministic synthetic params (Conv2d weight/bias, LayerNorm affine).
    w = jax.random.normal(kw_, (C2, C1, patch_size, patch_size), dtype=jnp.float32) * 0.05
    b = jax.random.normal(kb, (C2,), dtype=jnp.float32) * 0.05
    gamma = jnp.ones((C2,), dtype=jnp.float32)
    beta = jnp.zeros((C2,), dtype=jnp.float32)

    out, Ho, Wo = patch_embed(x, w, b, gamma, beta,
                              patch_size=patch_size, stride=stride)
    jax.block_until_ready(out)
    assert out.shape == (B, Ho * Wo, C2)
    assert bool(jnp.isfinite(out).all())
    print("KERNEL_OK")
</pallas_src>

<mosaic_0001>
module attributes {stable_mosaic.version = 11 : i64} {
  func.func @_patch_embed_kernel(%arg0: i32, %arg1: memref<32x196xbf16, #tpu.memory_space<vmem>>, %arg2: memref<196x32xbf16, #tpu.memory_space<vmem>>, %arg3: memref<1x32xf32, #tpu.memory_space<vmem>>, %arg4: memref<1x32xf32, #tpu.memory_space<vmem>>, %arg5: memref<1x32xf32, #tpu.memory_space<vmem>>, %arg6: memref<32x32xf32, #tpu.memory_space<vmem>>) attributes {dimension_semantics = [#tpu.dimension_semantics<parallel>], iteration_bounds = array<i64: 1>, scalar_prefetch = 0 : i64, scratch_operands = 0 : i64, tpu.core_type = #tpu.core_type<tc>, window_params = [{transform_indices = @transform_0, window_bounds = array<i64: 32, 196>}, {pipeline_mode = #tpu.pipeline_mode<synchronous>, transform_indices = @transform_1, window_bounds = array<i64: 196, 32>}, {pipeline_mode = #tpu.pipeline_mode<synchronous>, transform_indices = @transform_2, window_bounds = array<i64: 1, 32>}, {pipeline_mode = #tpu.pipeline_mode<synchronous>, transform_indices = @transform_3, window_bounds = array<i64: 1, 32>}, {pipeline_mode = #tpu.pipeline_mode<synchronous>, transform_indices = @transform_4, window_bounds = array<i64: 1, 32>}, {transform_indices = @transform_5, window_bounds = array<i64: 32, 32>}]} {
    %c0 = arith.constant 0 : index
    %c0_0 = arith.constant 0 : index
    %0 = vector.load %arg1[%c0, %c0_0] : memref<32x196xbf16, #tpu.memory_space<vmem>>, vector<32x196xbf16>
    %c0_1 = arith.constant 0 : index
    %c0_2 = arith.constant 0 : index
    %1 = vector.load %arg2[%c0_1, %c0_2] : memref<196x32xbf16, #tpu.memory_space<vmem>>, vector<196x32xbf16>
    %cst = arith.constant dense<0.000000e+00> : vector<32x32xf32>
    %2 = tpu.matmul %0, %1, %cst {dimension_numbers = #tpu.dot_dimension_numbers<[1], [0], [0], [1], [0, 0, 1, 1], [], []>} : vector<32x196xbf16>, vector<196x32xbf16>, vector<32x32xf32> -> vector<32x32xf32>
    %c0_3 = arith.constant 0 : index
    %c0_4 = arith.constant 0 : index
    %3 = vector.load %arg3[%c0_3, %c0_4] : memref<1x32xf32, #tpu.memory_space<vmem>>, vector<1x32xf32>
    %4 = vector.broadcast %3 : vector<1x32xf32> to vector<32x32xf32>
    %5 = arith.addf %2, %4 : vector<32x32xf32>
    %cst_5 = arith.constant dense<0.000000e+00> : vector<32xf32>
    %6 = vector.multi_reduction <add>, %5, %cst_5 [1] : vector<32x32xf32> to vector<32xf32>
    %7 = vector.shape_cast %6 : vector<32xf32> to vector<32x1xf32>
    %8 = arith.mulf %5, %5 : vector<32x32xf32>
    %cst_6 = arith.constant dense<0.000000e+00> : vector<32xf32>
    %9 = vector.multi_reduction <add>, %8, %cst_6 [1] : vector<32x32xf32> to vector<32xf32>
    %10 = vector.shape_cast %9 : vector<32xf32> to vector<32x1xf32>
    %cst_7 = arith.constant 3.125000e-02 : f32
    %11 = vector.broadcast %cst_7 : f32 to vector<32x1xf32>
    %12 = arith.mulf %7, %11 : vector<32x1xf32>
    %cst_8 = arith.constant 3.125000e-02 : f32
    %13 = vector.broadcast %cst_8 : f32 to vector<32x1xf32>
    %14 = arith.mulf %10, %13 : vector<32x1xf32>
    %15 = arith.mulf %12, %12 : vector<32x1xf32>
    %16 = arith.subf %14, %15 : vector<32x1xf32>
    %cst_9 = arith.constant 0.000000e+00 : f32
    %17 = vector.broadcast %cst_9 : f32 to vector<32x1xf32>
    %18 = arith.maximumf %16, %17 : vector<32x1xf32>
    %19 = vector.broadcast %12 : vector<32x1xf32> to vector<32x32xf32>
    %20 = arith.subf %5, %19 : vector<32x32xf32>
    %cst_10 = arith.constant 9.99999974E-6 : f32
    %21 = vector.broadcast %cst_10 : f32 to vector<32x1xf32>
    %22 = arith.addf %18, %21 : vector<32x1xf32>
    %23 = math.rsqrt %22 : vector<32x1xf32>
    %24 = vector.broadcast %23 : vector<32x1xf32> to vector<32x32xf32>
    %25 = arith.mulf %20, %24 : vector<32x32xf32>
    %c0_11 = arith.constant 0 : index
    %c0_12 = arith.constant 0 : index
    %26 = vector.load %arg4[%c0_11, %c0_12] : memref<1x32xf32, #tpu.memory_space<vmem>>, vector<1x32xf32>
    %27 = vector.broadcast %26 : vector<1x32xf32> to vector<32x32xf32>
    %28 = arith.mulf %25, %27 : vector<32x32xf32>
    %c0_13 = arith.constant 0 : index
    %c0_14 = arith.constant 0 : index
    %29 = vector.load %arg5[%c0_13, %c0_14] : memref<1x32xf32, #tpu.memory_space<vmem>>, vector<1x32xf32>
    %30 = vector.broadcast %29 : vector<1x32xf32> to vector<32x32xf32>
    %31 = arith.addf %28, %30 : vector<32x32xf32>
    %c0_15 = arith.constant 0 : index
    %c0_16 = arith.constant 0 : index
    %32 = vector.load %arg6[%c0_15, %c0_16] : memref<32x32xf32, #tpu.memory_space<vmem>>, vector<32x32xf32>
    tpu.vector_store %arg6[%c0_15, %c0_16], %31 {strides = array<i32>} : memref<32x32xf32, #tpu.memory_space<vmem>>, vector<32x32xf32>,
    return
  }
  func.func @transform_0(%arg0: i32) -> (i32, i32) {
    %c0_i32 = arith.constant 0 : i32
    %c0_i32_0 = arith.constant 0 : i32
    return %arg0, %c0_i32 : i32, i32
  }
  func.func @transform_1(%arg0: i32) -> (i32, i32) {
    %c0_i32 = arith.constant 0 : i32
    %c0_i32_0 = arith.constant 0 : i32
    %c0_i32_1 = arith.constant 0 : i32
    return %c0_i32, %c0_i32_0 : i32, i32
  }
  func.func @transform_2(%arg0: i32) -> (i32, i32) {
    %c0_i32 = arith.constant 0 : i32
    %c0_i32_0 = arith.constant 0 : i32
    %c0_i32_1 = arith.constant 0 : i32
    return %c0_i32, %c0_i32_0 : i32, i32
  }
  func.func @transform_3(%arg0: i32) -> (i32, i32) {
    %c0_i32 = arith.constant 0 : i32
    %c0_i32_0 = arith.constant 0 : i32
    %c0_i32_1 = arith.constant 0 : i32
    return %c0_i32, %c0_i32_0 : i32, i32
  }
  func.func @transform_4(%arg0: i32) -> (i32, i32) {
    %c0_i32 = arith.constant 0 : i32
    %c0_i32_0 = arith.constant 0 : i32
    %c0_i32_1 = arith.constant 0 : i32
    return %c0_i32, %c0_i32_0 : i32, i32
  }
  func.func @transform_5(%arg0: i32) -> (i32, i32) {
    %c0_i32 = arith.constant 0 : i32
    %c0_i32_0 = arith.constant 0 : i32
    return %arg0, %c0_i32 : i32, i32
  }
}

</mosaic_0001>

<llo_original>
// kernel: tpu_custom_call.1
$region0: #{tpu_custom_call.1}
  #allocation0 [shape = 'u32[]', space=smem, size = 0x4, offset = 0x4, fixed_abs, tag = 'smem constant byte address 0x4 - core index']
  #allocation1 [shape = 'u32[72,128]{1,0:T(1,128)}', space=vmem, size = 0x9000, scoped, tag = 'internal scratch']
  %s0 = inlined_call_operand.vmem [shape: bf16[32,196], index: 0, kind: input, shape index: {}]
  %s1 = inlined_call_operand.vmem [shape: bf16[196,32], index: 1, kind: input, shape index: {}]
  %s2 = inlined_call_operand.vmem [shape: f32[1,32], index: 2, kind: input, shape index: {}]
  %s3 = inlined_call_operand.vmem [shape: f32[1,32], index: 3, kind: input, shape index: {}]
  %s4 = inlined_call_operand.vmem [shape: f32[1,32], index: 4, kind: input, shape index: {}]
  %s5 = inlined_call_operand.hbm [shape: f32[32,32], index: 5, kind: output, shape index: {}]
  %s6 = sld [smem:[#allocation0]]
  $region30: #{tpu_custom_call.1} parent=0
    _
  %s8 = ssub.s32 1, %s6
  %s9 = scalar_select 0, %s8, %s6
  $region1: #{tpu_custom_call.1} parent=0
    #allocation2 [shape = 'u8[16384]{0}', space=vmem, size = 0x4000, scoped, tag = 'output window, operand 0, single buffered']
    #allocation3 [shape = 's32[1]{0}', space=sflag, size = 0x4, scoped, tag = 'scoped memory for tpu_custom_call.1']
    %10 = vsyncpa [#allocation3], 0
    // Predicated region
    $region2: #{tpu_custom_call.1} parent=1 // pred_check
      _
    $region3: #{tpu_custom_call.1} parent=1 // pred_check_branch
      %12 = sbr.rel (0) target = $region5
    $region4: #{tpu_custom_call.1} parent=1 // pred_region
      _
    $region5: #{tpu_custom_call.1} parent=1 // pred_fallthru
      _
    // Predicated region
    $region6: #{tpu_custom_call.1} parent=1 // pred_check
      _
    $region7: #{tpu_custom_call.1} parent=1 // pred_check_branch
      %14 = sbr.rel (0) target = $region9
    $region8: #{tpu_custom_call.1} parent=1 // pred_region
      _
    $region9: #{tpu_custom_call.1} parent=1 // pred_fallthru
      _
    // Predicated region
    $region10: #{tpu_custom_call.1} parent=1 // pred_check
      _
    $region11: #{tpu_custom_call.1} parent=1 // pred_check_branch
      %16 = sbr.rel (0) target = $region13
    $region12: #{tpu_custom_call.1} parent=1 // pred_region
      _
    $region13: #{tpu_custom_call.1} parent=1 // pred_fallthru
      _
    // Predicated region
    $region14: #{tpu_custom_call.1} parent=1 // pred_check
      _
    $region15: #{tpu_custom_call.1} parent=1 // pred_check_branch
      %18 = sbr.rel (0) target = $region17
    $region16: #{tpu_custom_call.1} parent=1 // pred_region
      _
    $region17: #{tpu_custom_call.1} parent=1 // pred_fallthru
      _
    // Predicated region
    $region18: #{tpu_custom_call.1} parent=1 // pred_check
      _
    $region19: #{tpu_custom_call.1} parent=1 // pred_check_branch
      %20 = sbr.rel (0) target = $region21
    $region20: #{tpu_custom_call.1} parent=1 // pred_region
      _
    $region21: #{tpu_custom_call.1} parent=1 // pred_fallthru
      _
    %v22 = vld [vmem:[%s0] sm:$0xff]
    %v23 = vld [vmem:[%s0 + $0x8] sm:$0xff]
    %v24 = vld [vmem:[%s0 + $0x10] sm:$0xff]
    %v25 = vld [vmem:[%s0 + $0x18] sm:$0xff]
    %v26 = vld [vmem:[%s1] sm:$0xf]
    %v27 = vld [vmem:[%s1 + $0x4] sm:$0xf]
    %v28 = vld [vmem:[%s1 + $0x8] sm:$0xf]
    %v29 = vld [vmem:[%s1 + $0xc] sm:$0xf]
    %v30 = vld [vmem:[%s1 + $0x10] sm:$0xf]
    %v31 = vld [vmem:[%s1 + $0x14] sm:$0xf]
    %v32 = vld [vmem:[%s1 + $0x18] sm:$0xf]
    %v33 = vld [vmem:[%s1 + $0x1c] sm:$0xf]
    %v34 = vld [vmem:[%s1 + $0x20] sm:$0xf]
    %v35 = vld [vmem:[%s1 + $0x24] sm:$0xf]
    %v36 = vld [vmem:[%s1 + $0x28] sm:$0xf]
    %v37 = vld [vmem:[%s1 + $0x2c] sm:$0xf]
    %v38 = vld [vmem:[%s1 + $0x30] sm:$0xf]
    %v39 = vld [vmem:[%s1 + $0x34] sm:$0xf]
    %v40 = vld [vmem:[%s1 + $0x38] sm:$0xf]
    %v41 = vld [vmem:[%s1 + $0x3c] sm:$0xf]
    %v42 = vld [vmem:[%s1 + $0x40] sm:$0xf]
    %v43 = vld [vmem:[%s1 + $0x44] sm:$0xf]
    %v44 = vld [vmem:[%s1 + $0x48] sm:$0xf]
    %v45 = vld [vmem:[%s1 + $0x4c] sm:$0xf]
    %v46 = vld [vmem:[%s1 + $0x50] sm:$0xf]
    %v47 = vld [vmem:[%s1 + $0x54] sm:$0xf]
    %v48 = vld [vmem:[%s1 + $0x58] sm:$0xf]
    %v49 = vld [vmem:[%s1 + $0x5c] sm:$0xf]
    %v50 = vld [vmem:[%s1 + $0x60] sm:$0x3]
    %v51 = vld [vmem:[%s2] sm:$0x1]
    %v53 = vperm.slane %v51, 0
    %v59 = vunpack.c.l.b16 %v22
    %v60 = vunpack.c.h.b16 %v22
    %v61 = vunpack.c.l.b16 %v23
    %v62 = vunpack.c.h.b16 %v23
    %v63 = vunpack.c.l.b16 %v24
    %v64 = vunpack.c.h.b16 %v24
    %v65 = vunpack.c.l.b16 %v25
    %v66 = vunpack.c.h.b16 %v25
    %v67 = vpack.c.b16 %v61, %v59
    %v68 = vpack.c.b16 %v62, %v60
    %v69 = vpack.c.b16 %v65, %v63
    %v70 = vpack.c.b16 %v66, %v64
    %v98 = vunpack.c.l.b16 %v26
    %v99 = vunpack.c.l.b16 %v27
    %v100 = vunpack.c.l.b16 %v28
    %v101 = vunpack.c.l.b16 %v29
    %v102 = vunpack.c.l.b16 %v30
    %v103 = vunpack.c.l.b16 %v31
    %v104 = vunpack.c.l.b16 %v32
    %v105 = vunpack.c.l.b16 %v33
    %v106 = vunpack.c.l.b16 %v34
    %v107 = vunpack.c.l.b16 %v35
    %v108 = vunpack.c.l.b16 %v36
    %v109 = vunpack.c.l.b16 %v37
    %v110 = vunpack.c.l.b16 %v38
    %v111 = vunpack.c.l.b16 %v39
    %v112 = vunpack.c.l.b16 %v40
    %v113 = vunpack.c.l.b16 %v41
    %v114 = vunpack.c.l.b16 %v42
    %v115 = vunpack.c.l.b16 %v43
    %v116 = vunpack.c.l.b16 %v44
    %v117 = vunpack.c.l.b16 %v45
    %v118 = vunpack.c.l.b16 %v46
    %v119 = vunpack.c.l.b16 %v47
    %v120 = vunpack.c.l.b16 %v48
    %v121 = vunpack.c.l.b16 %v49
    %v122 = vunpack.c.l.b16 %v50
    %v123 = vpack.c.b16 %v99, %v98
    %v124 = vpack.c.b16 %v101, %v100
    %v125 = vpack.c.b16 %v103, %v102
    %v126 = vpack.c.b16 %v105, %v104
    %v127 = vpack.c.b16 %v107, %v106
    %v128 = vpack.c.b16 %v109, %v108
    %v129 = vpack.c.b16 %v111, %v110
    %v130 = vpack.c.b16 %v113, %v112
    %v131 = vpack.c.b16 %v115, %v114
    %v132 = vpack.c.b16 %v117, %v116
    %v133 = vpack.c.b16 %v119, %v118
    %v134 = vpack.c.b16 %v121, %v120
    %v135 = vpack.c.b16 %v122, %v122
    %vm148 = vcmask 556032
    %v150 = vsel %vm148, %v68, 0
    %v153 = vsel %vm148, %v70, 0
    %vm155 = vcmask 1041408
    %v157 = vsel %vm155, %v135, 0
    %159 = vmatpush.bf16.msra.mxu0 %v130
    %160 = vmatpush.bf16.msra.mxu0 %v129
    %161 = vmatpush.bf16.msra.mxu0 %v128
    %162 = vmatpush.bf16.msra.mxu0 %v127
    %163 = vmatpush.bf16.msra.mxu0 %v126
    %164 = vmatpush.bf16.msra.mxu0 %v125
    %165 = vmatpush.bf16.msra.mxu0 %v124
    %166 = vmatpush.bf16.msra.mxu0 %v123
    %167 = vmatmul.bf16.gmra.mxu0 %v67
    %v168 = vpop.f32.mrf.mxu0
    %v169 = vadd.f32 %v53, %v168
    %v170 = vpop.f32.mrf.mxu0
    %v171 = vadd.f32 %v53, %v170
    %172 = vmatmul.bf16.gmra.mxu0 %v69
    %v173 = vpop.f32.mrf.mxu0
    %v174 = vadd.f32 %v53, %v173
    %v175 = vpop.f32.mrf.mxu0
    %v176 = vadd.f32 %v53, %v175
    %177 = vdwg.mxu0
    %178 = vmatpush.bf16.msra.mxu0 0
    %179 = vmatpush.bf16.msra.mxu0 0
    %180 = vmatpush.bf16.msra.mxu0 0
    %181 = vmatpush.bf16.msra.mxu0 %v157
    %182 = vmatpush.bf16.msra.mxu0 %v134
    %183 = vmatpush.bf16.msra.mxu0 %v133
    %184 = vmatpush.bf16.msra.mxu0 %v132
    %185 = vmatpush.bf16.msra.mxu0 %v131
    %186 = vmatmul.bf16.gmra.mxu0 %v150
    %v187 = vpop.f32.mrf.mxu0
    %v188 = vadd.f32 %v169, %v187
    %v189 = vpop.f32.mrf.mxu0
    %v190 = vadd.f32 %v171, %v189
    %191 = vmatmul.bf16.gmra.mxu0 %v153
    %v192 = vpop.f32.mrf.mxu0
    %v193 = vadd.f32 %v174, %v192
    %v194 = vpop.f32.mrf.mxu0
    %v195 = vadd.f32 %v176, %v194
    %196 = vdwg.mxu0
    %vm197 = vcmask 261120
    %v198 = vsel %vm197, %v188, 0.0
    %199 = vadd.xlane.f32.xlu0 %v198
    %v200 = vpop.xlane.xlu0 %199
    %v201 = vsel %vm197, %v190, 0.0
    %202 = vadd.xlane.f32.xlu0 %v201
    %v203 = vpop.xlane.xlu0 %202
    %v204 = vsel %vm197, %v193, 0.0
    %205 = vadd.xlane.f32.xlu0 %v204
    %v206 = vpop.xlane.xlu0 %205
    %v207 = vsel %vm197, %v195, 0.0
    %208 = vadd.xlane.f32.xlu0 %v207
    %v209 = vpop.xlane.xlu0 %208
    %v210 = vmul.f32 %v188, %v188
    %v211 = vmul.f32 %v190, %v190
    %v212 = vmul.f32 %v193, %v193
    %v213 = vmul.f32 %v195, %v195
    %v214 = vsel %vm197, %v210, 0.0
    %215 = vadd.xlane.f32.xlu0 %v214
    %v216 = vpop.xlane.xlu0 %215
    %v217 = vsel %vm197, %v211, 0.0
    %218 = vadd.xlane.f32.xlu0 %v217
    %v219 = vpop.xlane.xlu0 %218
    %v220 = vsel %vm197, %v212, 0.0
    %221 = vadd.xlane.f32.xlu0 %v220
    %v222 = vpop.xlane.xlu0 %221
    %v223 = vsel %vm197, %v213, 0.0
    %224 = vadd.xlane.f32.xlu0 %v223
    %v225 = vpop.xlane.xlu0 %224
    %v226 = vmul.f32 %v200, 0.03125
    %v227 = vmul.f32 %v203, 0.03125
    %v228 = vmul.f32 %v206, 0.03125
    %v229 = vmul.f32 %v209, 0.03125
    %v230 = vmul.f32 %v216, 0.03125
    %v231 = vmul.f32 %v219, 0.03125
    %v232 = vmul.f32 %v222, 0.03125
    %v233 = vmul.f32 %v225, 0.03125
    %v234 = vmul.f32 %v226, %v226
    %v235 = vmul.f32 %v227, %v227
    %v236 = vmul.f32 %v228, %v228
    %v237 = vmul.f32 %v229, %v229
    %v238 = vsub.f32 %v230, %v234
    %v239 = vsub.f32 %v231, %v235
    %v240 = vsub.f32 %v232, %v236
    %v241 = vsub.f32 %v233, %v237
    %v242 = vmax.f32 %v238, 0.0
    %v243 = vmax.f32 %v239, 0.0
    %v244 = vmax.f32 %v240, 0.0
    %v245 = vmax.f32 %v241, 0.0
    %v246 = vsub.f32 %v188, %v226
    %v247 = vsub.f32 %v190, %v227
    %v248 = vsub.f32 %v193, %v228
    %v249 = vsub.f32 %v195, %v229
    %v250 = vadd.f32 %v242, 1e-05
    %v251 = vadd.f32 %v243, 1e-05
    %v252 = vadd.f32 %v244, 1e-05
    %v253 = vadd.f32 %v245, 1e-05
    %v254 = vrsqrt.pop %v250
    %v255 = vmul.f32 %v254, %v250
    %v256 = vmul.f32 %v255, %v254
    %v257 = vmul.f32 0.5, %v256
    %v258 = vsub.f32 1.5, %v257
    %v259 = vmul.f32 %v254, %v258
    %vm260 = vweird.f32 %v250
    %vm261 = vweird.f32 %v254
    %vm262 = vmor %vm260, %vm261
    %v263 = vsel %vm262, %v254, %v259
    %v264 = vrsqrt.pop %v251
    %v265 = vmul.f32 %v264, %v251
    %v266 = vmul.f32 %v265, %v264
    %v267 = vmul.f32 0.5, %v266
    %v268 = vsub.f32 1.5, %v267
    %v269 = vmul.f32 %v264, %v268
    %vm270 = vweird.f32 %v251
    %vm271 = vweird.f32 %v264
    %vm272 = vmor %vm270, %vm271
    %v273 = vsel %vm272, %v264, %v269
    %v274 = vrsqrt.pop %v252
    %v275 = vmul.f32 %v274, %v252
    %v276 = vmul.f32 %v275, %v274
    %v277 = vmul.f32 0.5, %v276
    %v278 = vsub.f32 1.5, %v277
    %v279 = vmul.f32 %v274, %v278
    %vm280 = vweird.f32 %v252
    %vm281 = vweird.f32 %v274
    %vm282 = vmor %vm280, %vm281
    %v283 = vsel %vm282, %v274, %v279
    %v284 = vrsqrt.pop %v253
    %v285 = vmul.f32 %v284, %v253
    %v286 = vmul.f32 %v285, %v284
    %v287 = vmul.f32 0.5, %v286
    %v288 = vsub.f32 1.5, %v287
    %v289 = vmul.f32 %v284, %v288
    %vm290 = vweird.f32 %v253
    %vm291 = vweird.f32 %v284
    %vm292 = vmor %vm290, %vm291
    %v293 = vsel %vm292, %v284, %v289
    %v294 = vmul.f32 %v246, %v263
    %v295 = vmul.f32 %v247, %v273
    %v296 = vmul.f32 %v248, %v283
    %v297 = vmul.f32 %v249, %v293
    %v298 = vld [vmem:[%s3] sm:$0x1]
    %v300 = vperm.slane %v298, 0
    %v302 = vmul.f32 %v294, %v300
    %v303 = vmul.f32 %v295, %v300
    %v304 = vmul.f32 %v296, %v300
    %v305 = vmul.f32 %v297, %v300
    %v306 = vld [vmem:[%s4] sm:$0x1]
    %v308 = vperm.slane %v306, 0
    %v310 = vadd.f32 %v302, %v308
    %v311 = vadd.f32 %v303, %v308
    %v312 = vadd.f32 %v304, %v308
    %v313 = vadd.f32 %v305, %v308
    %314 = vst.msk [vmem:[#allocation2] sm:$0xff] %vm197, %v310
    %315 = vst.msk [vmem:[#allocation2 + $0x8] sm:$0xff] %vm197, %v311
    %316 = vst.msk [vmem:[#allocation2 + $0x10] sm:$0xff] %vm197, %v312
    %317 = vst.msk [vmem:[#allocation2 + $0x18] sm:$0xff] %vm197, %v313
    // Predicated region
    $region22: #{tpu_custom_call.1} parent=1 // pred_check
      _
    $region23: #{tpu_custom_call.1} parent=1 // pred_check_branch
      %319 = sbr.rel (0) target = $region25
    $region24: #{tpu_custom_call.1} parent=1 // pred_region
      %321 = vsyncadd [#allocation3], 0
      %s322 = sshll.u32 [#allocation2], 4
      %s323 = int_to_ptr.vmem [resolvable:$true] %s322
      %s324 = sshll.u32 %s5, 4
      %s325 = int_to_ptr.hbm [resolvable:$true] %s324
      %330 = dma.vmem_to_hbm [thread:$0]  %s323, 512, %s325, [#allocation3], 128, 128, 8
    $region25: #{tpu_custom_call.1} parent=1 // pred_fallthru
      _
    // Predicated region
    $region26: #{tpu_custom_call.1} parent=1 // pred_check
      _
    $region27: #{tpu_custom_call.1} parent=1 // pred_check_branch
      %332 = sbr.rel (0) target = $region29
    $region28: #{tpu_custom_call.1} parent=1 // pred_region
      %334 = dma.done [#allocation3], 512
    $region29: #{tpu_custom_call.1} parent=1 // pred_fallthru
      _
    %335 = vsyncpa [#allocation3], 1

</llo_original>
